<compile_context>
chip_gen: v6e
topology: v6e:2x2x1
jax: 0.10.0
libtpu: 0.0.40
codegen_flags: <defaults>
</compile_context>

<pallas_src>
import functools

import jax
import jax.numpy as jnp
from jax.experimental import pallas as pl
from jax.experimental.pallas import tpu as pltpu


def _round_up(v, m):
    return ((v + m - 1) // m) * m


def _poly_kernel(x_ref, coef_ref, o_ref, *, n_pows, start_pow):
    # x_ref:    (TB, TF)  batch/feature tile of inputs
    # coef_ref: (P,  TF)  coefficient rows (power axis on sublanes, lane-dense)
    # o_ref:    (TB, TF)  output tile
    x = x_ref[...].astype(jnp.float32)

    def crow(p):
        # one coefficient row, implicit sublane broadcast
        return coef_ref[p, :][None, :].astype(jnp.float32)

    if n_pows >= 2:
        # Fold the leading coefficient into the first FMA step (no broadcast temp).
        acc = crow(n_pows - 1) * x + crow(n_pows - 2)
        for p in range(n_pows - 3, -1, -1):      # static unroll over small P
            acc = acc * x + crow(p)
    else:
        # Degenerate single-term polynomial.
        acc = jnp.broadcast_to(crow(0), x.shape)

    if start_pow == 1:                           # zero_order=False: one extra x factor
        acc = acc * x

    o_ref[...] = acc.astype(o_ref.dtype)


def polynomial_forward(x, coef, *, degree, zero_order=True,
                       block_batch=512, block_features=1024):
    """Pallas implementation of Polynomial.forward.

    Args:
      x:    (batch, in_features)
      coef: (in_features, degree + int(zero_order))
    Returns:
      y:    (batch, in_features)
    """
    batch, in_features = x.shape
    n_pows = degree + int(zero_order)
    assert n_pows >= 1, "degree=0 with zero_order=False has no terms"
    assert coef.shape == (in_features, n_pows)
    start_pow = 1 - int(zero_order)

    itemsize = jnp.dtype(x.dtype).itemsize
    sub = max(8, 32 // itemsize)                 # 8 (f32), 16 (bf16), 32 (int8)
    assert block_batch % sub == 0 and block_features % 128 == 0

    # Lane-dense coefficient layout: (P, F).
    coef_t = jnp.transpose(coef)

    # Tile sizes; no padding of x/out -- Pallas masks partial boundary blocks.
    tb = min(block_batch, _round_up(batch, sub))
    tf = min(block_features, _round_up(in_features, 128))

    # Feature axis OUTER, batch axis INNER: coef block index (0, j) is constant
    # across the inner batch sweep, so its DMA is elided after the first fetch.
    grid = (pl.cdiv(in_features, tf), pl.cdiv(batch, tb))

    kernel = functools.partial(_poly_kernel, n_pows=n_pows, start_pow=start_pow)

    cost = pl.CostEstimate(
        flops=2 * n_pows * batch * in_features,
        transcendentals=0,
        bytes_accessed=2 * batch * in_features * itemsize
        + n_pows * in_features * jnp.dtype(coef.dtype).itemsize,
    )

    return pl.pallas_call(
        kernel,
        out_shape=jax.ShapeDtypeStruct((batch, in_features), x.dtype),
        grid_spec=pltpu.PrefetchScalarGridSpec(
            num_scalar_prefetch=0,
            grid=grid,
            in_specs=[
                pl.BlockSpec((tb, tf), lambda j, i: (i, j)),        # x tile
                pl.BlockSpec((n_pows, tf), lambda j, i: (0, j)),    # coef stripe (resident per j)
            ],
            out_specs=pl.BlockSpec((tb, tf), lambda j, i: (i, j)),
        ),
        compiler_params=pltpu.CompilerParams(
            dimension_semantics=("parallel", "parallel"),
            vmem_limit_bytes=32 << 20,
        ),
        cost_estimate=cost,
    )(x, coef_t)


def polynomial_reference(x, coef, *, degree, zero_order=True):
    xf = x.astype(jnp.float32)
    cf = coef.astype(jnp.float32)
    pows = jnp.arange(1 - int(zero_order), degree + 1, dtype=jnp.float32)
    return jnp.sum(xf[..., None] ** pows * cf, axis=-1).astype(x.dtype)


if __name__ == "__main__":
    key = jax.random.PRNGKey(0)
    k_x, k_c = jax.random.split(key)

    # Small config matching the module's forward.
    batch = 8
    in_features = 16
    degree = 3
    zero_order = True
    n_pows = degree + int(zero_order)

    coef = jax.random.normal(k_c, (in_features, n_pows), dtype=jnp.float32)
    x = jax.random.normal(k_x, (batch, in_features), dtype=jnp.float32)

    y = polynomial_forward(x, coef, degree=degree, zero_order=zero_order)
    y = jax.block_until_ready(y)
    y_ref = polynomial_reference(x, coef, degree=degree, zero_order=zero_order)
    assert y.shape == (batch, in_features)
    assert jnp.allclose(y, y_ref, atol=1e-5, rtol=1e-5), "mismatch vs reference"

    # zero_order=False plus non-aligned shapes -> exercises partial boundary
    # blocks (no padding, no output slice) and real tiling along both axes.
    k_x2, k_c2 = jax.random.split(k_x)
    b2, f2, deg2 = 1030, 300, 2
    coef2 = jax.random.normal(k_c2, (f2, deg2), dtype=jnp.float32)
    x2 = jax.random.normal(k_x2, (b2, f2), dtype=jnp.float32)
    y2 = jax.block_until_ready(
        polynomial_forward(x2, coef2, degree=deg2, zero_order=False,
                           block_batch=512, block_features=128))
    y2_ref = polynomial_reference(x2, coef2, degree=deg2, zero_order=False)
    assert jnp.allclose(y2, y2_ref, atol=1e-4, rtol=1e-4), "mismatch vs reference (tiled)"

    # bf16 I/O path (compute stays in f32 inside the kernel).
    k_x3, k_c3 = jax.random.split(k_x2)
    b3, f3, deg3 = 64, 256, 3
    coef3 = jax.random.normal(k_c3, (f3, deg3 + 1), dtype=jnp.float32)
    x3 = jax.random.normal(k_x3, (b3, f3), dtype=jnp.bfloat16)
    y3 = jax.block_until_ready(
        polynomial_forward(x3, coef3, degree=deg3, zero_order=True))
    y3_ref = polynomial_reference(x3, coef3, degree=deg3, zero_order=True)
    assert jnp.allclose(y3.astype(jnp.float32), y3_ref.astype(jnp.float32),
                        atol=5e-2, rtol=5e-2), "mismatch vs reference (bf16)"

    print("KERNEL_OK")
</pallas_src>

<mosaic_0001>
module attributes {stable_mosaic.version = 11 : i64} {
  func.func @_poly_kernel(%arg0: i32, %arg1: i32, %arg2: memref<8x128xf32, #tpu.memory_space<vmem>>, %arg3: memref<4x128xf32, #tpu.memory_space<vmem>>, %arg4: memref<8x128xf32, #tpu.memory_space<vmem>>) attributes {dimension_semantics = [#tpu.dimension_semantics<parallel>, #tpu.dimension_semantics<parallel>], iteration_bounds = array<i64: 1, 1>, scalar_prefetch = 0 : i64, scratch_operands = 0 : i64, tpu.core_type = #tpu.core_type<tc>, window_params = [{transform_indices = @transform_0, window_bounds = array<i64: 8, 128>}, {transform_indices = @transform_1, window_bounds = array<i64: 4, 128>}, {transform_indices = @transform_2, window_bounds = array<i64: 8, 128>}]} {
    %c0 = arith.constant 0 : index
    %c0_0 = arith.constant 0 : index
    %0 = vector.load %arg2[%c0, %c0_0] : memref<8x128xf32, #tpu.memory_space<vmem>>, vector<8x128xf32>
    %c3 = arith.constant 3 : index
    %c0_1 = arith.constant 0 : index
    %1 = vector.load %arg3[%c3, %c0_1] : memref<4x128xf32, #tpu.memory_space<vmem>>, vector<1x128xf32>
    %2 = vector.shape_cast %1 : vector<1x128xf32> to vector<128xf32>
    %3 = vector.shape_cast %2 : vector<128xf32> to vector<1x128xf32>
    %4 = vector.broadcast %3 : vector<1x128xf32> to vector<8x128xf32>
    %5 = arith.mulf %4, %0 : vector<8x128xf32>
    %c2 = arith.constant 2 : index
    %c0_2 = arith.constant 0 : index
    %6 = vector.load %arg3[%c2, %c0_2] : memref<4x128xf32, #tpu.memory_space<vmem>>, vector<1x128xf32>
    %7 = vector.shape_cast %6 : vector<1x128xf32> to vector<128xf32>
    %8 = vector.shape_cast %7 : vector<128xf32> to vector<1x128xf32>
    %9 = vector.broadcast %8 : vector<1x128xf32> to vector<8x128xf32>
    %10 = arith.addf %5, %9 : vector<8x128xf32>
    %11 = arith.mulf %10, %0 : vector<8x128xf32>
    %c1 = arith.constant 1 : index
    %c0_3 = arith.constant 0 : index
    %12 = vector.load %arg3[%c1, %c0_3] : memref<4x128xf32, #tpu.memory_space<vmem>>, vector<1x128xf32>
    %13 = vector.shape_cast %12 : vector<1x128xf32> to vector<128xf32>
    %14 = vector.shape_cast %13 : vector<128xf32> to vector<1x128xf32>
    %15 = vector.broadcast %14 : vector<1x128xf32> to vector<8x128xf32>
    %16 = arith.addf %11, %15 : vector<8x128xf32>
    %17 = arith.mulf %16, %0 : vector<8x128xf32>
    %c0_4 = arith.constant 0 : index
    %c0_5 = arith.constant 0 : index
    %18 = vector.load %arg3[%c0_4, %c0_5] : memref<4x128xf32, #tpu.memory_space<vmem>>, vector<1x128xf32>
    %19 = vector.shape_cast %18 : vector<1x128xf32> to vector<128xf32>
    %20 = vector.shape_cast %19 : vector<128xf32> to vector<1x128xf32>
    %21 = vector.broadcast %20 : vector<1x128xf32> to vector<8x128xf32>
    %22 = arith.addf %17, %21 : vector<8x128xf32>
    %c0_6 = arith.constant 0 : index
    %c0_7 = arith.constant 0 : index
    %23 = vector.load %arg4[%c0_6, %c0_7] : memref<8x128xf32, #tpu.memory_space<vmem>>, vector<8x128xf32>
    tpu.vector_store %arg4[%c0_6, %c0_7], %22 {strides = array<i32>} : memref<8x128xf32, #tpu.memory_space<vmem>>, vector<8x128xf32>,
    return
  }
  func.func @transform_0(%arg0: i32, %arg1: i32) -> (i32, i32) {
    %c0_i32 = arith.constant 0 : i32
    return %arg1, %arg0 : i32, i32
  }
  func.func @transform_1(%arg0: i32, %arg1: i32) -> (i32, i32) {
    %c0_i32 = arith.constant 0 : i32
    %c0_i32_0 = arith.constant 0 : i32
    return %c0_i32, %arg0 : i32, i32
  }
  func.func @transform_2(%arg0: i32, %arg1: i32) -> (i32, i32) {
    %c0_i32 = arith.constant 0 : i32
    return %arg1, %arg0 : i32, i32
  }
}

</mosaic_0001>

<llo_original>
// kernel: tpu_custom_call.1
$region0: #{tpu_custom_call.1}
  #allocation0 [shape = 'u32[]', space=smem, size = 0x4, offset = 0x4, fixed_abs, tag = 'smem constant byte address 0x4 - core index']
  #allocation1 [shape = 'u32[144,128]{1,0:T(1,128)}', space=vmem, size = 0x12000, scoped, tag = 'internal scratch']
  %s0 = inlined_call_operand.hbm [shape: f32[8,16], index: 0, kind: input, shape index: {}]
  %s1 = inlined_call_operand.hbm [shape: f32[4,16], index: 1, kind: input, shape index: {}]
  %s2 = inlined_call_operand.hbm [shape: f32[8,16], index: 2, kind: output, shape index: {}]
  %s3 = sld [smem:[#allocation0]]
  $region26: #{tpu_custom_call.1} parent=0
    _
  %s5 = ssub.s32 1, %s3
  %s6 = scalar_select 0, %s5, %s3
  $region1: #{tpu_custom_call.1} parent=0
    #allocation2 [shape = 'u8[4096]{0}', space=vmem, size = 0x1000, scoped, tag = 'input window, operand 0, single buffered']
    #allocation3 [shape = 's32[1]{0}', space=sflag, size = 0x4, scoped, tag = 'scoped memory for tpu_custom_call.1']
    #allocation4 [shape = 's32[1]{0}', space=sflag, size = 0x4, scoped, tag = 'scoped memory for tpu_custom_call.1']
    #allocation5 [shape = 'u8[2048]{0}', space=vmem, size = 0x800, scoped, tag = 'input window, operand 1, single buffered']
    #allocation6 [shape = 's32[1]{0}', space=sflag, size = 0x4, scoped, tag = 'scoped memory for tpu_custom_call.1']
    #allocation7 [shape = 'u8[4096]{0}', space=vmem, size = 0x1000, scoped, tag = 'output window, operand 0, single buffered']
    %7 = vsyncpa [#allocation3], 0
    %8 = vsyncpa [#allocation6], 0
    %9 = vsyncpa [#allocation4], 0
    // Predicated region
    $region2: #{tpu_custom_call.1} parent=1 // pred_check
      _
    $region3: #{tpu_custom_call.1} parent=1 // pred_check_branch
      %11 = sbr.rel (0) target = $region5
    $region4: #{tpu_custom_call.1} parent=1 // pred_region
      %s13 = ssub.s32 128, 128
      %14 = vsyncadd [#allocation3], %s13
      %s16 = sshll.u32 [#allocation2], 4
      %s17 = int_to_ptr.vmem [resolvable:$true] %s16
      %19 = dma.hbm_to_vmem [thread:$0]  %s0, 128, %s17, [#allocation3]
    $region5: #{tpu_custom_call.1} parent=1 // pred_fallthru
      _
    // Predicated region
    $region6: #{tpu_custom_call.1} parent=1 // pred_check
      _
    $region7: #{tpu_custom_call.1} parent=1 // pred_check_branch
      %21 = sbr.rel (0) target = $region9
    $region8: #{tpu_custom_call.1} parent=1 // pred_region
      %s23 = ssub.s32 64, 64
      %24 = vsyncadd [#allocation6], %s23
      %s26 = sshll.u32 [#allocation5], 4
      %s27 = int_to_ptr.vmem [resolvable:$true] %s26
      %29 = dma.hbm_to_vmem [thread:$0]  %s1, 64, %s27, [#allocation6]
    $region9: #{tpu_custom_call.1} parent=1 // pred_fallthru
      _
    // Predicated region
    $region10: #{tpu_custom_call.1} parent=1 // pred_check
      _
    $region11: #{tpu_custom_call.1} parent=1 // pred_check_branch
      %31 = sbr.rel (0) target = $region13
    $region12: #{tpu_custom_call.1} parent=1 // pred_region
      %32 = dma.done [#allocation3], 128
    $region13: #{tpu_custom_call.1} parent=1 // pred_fallthru
      _
    // Predicated region
    $region14: #{tpu_custom_call.1} parent=1 // pred_check
      _
    $region15: #{tpu_custom_call.1} parent=1 // pred_check_branch
      %34 = sbr.rel (0) target = $region17
    $region16: #{tpu_custom_call.1} parent=1 // pred_region
      %35 = dma.done [#allocation6], 64
    $region17: #{tpu_custom_call.1} parent=1 // pred_fallthru
      _
    %v36 = vld [vmem:[#allocation2] sm:$0xff]
    %v37 = vld [vmem:[#allocation5 + $0x3] sm:$0x1]
    %v38 = vlaneseq
    %v39 = vshrl.u32 %v38, 7
    %v40 = vsub.s32 0, %v39
    %v41 = vrot.slane %v37, %v40
    %v42 = vmul.f32 %v41, %v36
    %v43 = vld [vmem:[#allocation5 + $0x2] sm:$0x1]
    %v44 = vlaneseq
    %v45 = vshrl.u32 %v44, 7
    %v46 = vsub.s32 0, %v45
    %v47 = vrot.slane %v43, %v46
    %v48 = vadd.f32 %v42, %v47
    %v49 = vmul.f32 %v48, %v36
    %v50 = vld [vmem:[#allocation5 + $0x1] sm:$0x1]
    %v51 = vlaneseq
    %v52 = vshrl.u32 %v51, 7
    %v53 = vsub.s32 0, %v52
    %v54 = vrot.slane %v50, %v53
    %v55 = vadd.f32 %v49, %v54
    %v56 = vmul.f32 %v55, %v36
    %v57 = vld [vmem:[#allocation5] sm:$0x1]
    %v58 = vlaneseq
    %v59 = vshrl.u32 %v58, 7
    %v60 = vsub.s32 0, %v59
    %v61 = vrot.slane %v57, %v60
    %v62 = vadd.f32 %v56, %v61
    %63 = vst [vmem:[#allocation7] sm:$0xff] %v62
    // Predicated region
    $region18: #{tpu_custom_call.1} parent=1 // pred_check
      _
    $region19: #{tpu_custom_call.1} parent=1 // pred_check_branch
      %65 = sbr.rel (0) target = $region21
    $region20: #{tpu_custom_call.1} parent=1 // pred_region
      %s67 = ssub.s32 128, 128
      %68 = vsyncadd [#allocation4], %s67
      %s70 = sshll.u32 [#allocation7], 4
      %s71 = int_to_ptr.vmem [resolvable:$true] %s70
      %73 = dma.vmem_to_hbm [thread:$0]  %s71, 128, %s2, [#allocation4]
    $region21: #{tpu_custom_call.1} parent=1 // pred_fallthru
      _
    // Predicated region
    $region22: #{tpu_custom_call.1} parent=1 // pred_check
      _
    $region23: #{tpu_custom_call.1} parent=1 // pred_check_branch
      %75 = sbr.rel (0) target = $region25
    $region24: #{tpu_custom_call.1} parent=1 // pred_region
      %76 = dma.done [#allocation4], 128
    $region25: #{tpu_custom_call.1} parent=1 // pred_fallthru
      _
    %77 = vsyncpa [#allocation3], 1
    %78 = vsyncpa [#allocation6], 1
    %79 = vsyncpa [#allocation4], 1

</llo_original>
